<compile_context>
chip_gen: v5e
topology: v5e:2x2
jax: 0.10.0
libtpu: 0.0.40
codegen_flags: <defaults>
</compile_context>

<pallas_src>
import functools

import jax
import jax.numpy as jnp
from jax.experimental import pallas as pl
from jax.experimental.pallas import tpu as pltpu


def decode_mu_law_jnp(y, mu=256):
    """Mu-law decode, same formula as the numpy version in the module."""
    m = mu - 1
    y = y.astype(jnp.float32) + 1.0
    fx = (y - 0.5) / m * 2.0 - 1.0
    return jnp.sign(fx) / m * ((1.0 + m) ** jnp.abs(fx) - 1.0)


def _cdiv(a, b):
    return (a + b - 1) // b


def _round_up(x, m):
    return (x + m - 1) // m * m


def _emd_kernel(pred_ref, y_ref, dec_y_ref, dec_ref, out_ref, *, n_rows, eps):
    # pred_ref:  (TM, mu) f32   predicted distribution tile
    # y_ref:     (TM, 1)  i32   labels tile
    # dec_y_ref: (TM, 1)  f32   dec[true_y] (gathered in the wrapper)
    # dec_ref:   (1, mu)  f32   mu-law decoded class values (resident)
    # out_ref:   (1, 8, mu) f32 per-shard partial-sum accumulator (resident
    #                           across the reduction axis)
    s = pl.program_id(0)                 # parallel shard (v7x TensorCore)
    j = pl.program_id(1)                 # reduction step within the shard
    tiles_per_shard = pl.num_programs(1)
    tile_rows, mu = pred_ref.shape

    @pl.when(j == 0)
    def _init():
        out_ref[...] = jnp.zeros_like(out_ref)

    # Unclamped logical row offset of this (shard, step).  The index_map may
    # clamp the DMA for a fully out-of-range tile; this mask (not the clamped
    # index) decides what contributes, so duplicated fetches contribute zero.
    row_start = (s * tiles_per_shard + j) * tile_rows

    pred = pred_ref[...]                                               # (TM, mu)
    idx = y_ref[...]                                                   # (TM, 1)
    dec = dec_ref[...]                                                 # (1, mu)

    rows = jax.lax.broadcasted_iota(jnp.int32, (tile_rows, 1), 0)      # (TM, 1)
    valid = (row_start + rows) < n_rows                                # (TM, 1)

    cols = jax.lax.broadcasted_iota(jnp.int32, (tile_rows, mu), 1)     # (TM, mu)
    is_hot = cols == idx                                               # (TM, mu)

    # p = log(|1 - one_hot - pred|) without materializing the one-hot floats.
    # The valid-mask MUST be applied before the log so garbage tail rows give
    # log(1) = 0 exactly.
    resid = jnp.abs(jnp.where(is_hot, pred, 1.0 - pred))               # (TM, mu)
    p = jnp.log(jnp.where(valid, resid, 1.0))                          # (TM, mu)

    # d[y, k] = (dec[y] - dec[k])^2 + eps.  dec[y] arrives precomputed; mask
    # the tail so garbage (possibly NaN) rows cannot poison d * p.
    dec_y = jnp.where(valid, dec_y_ref[...], 0.0)                      # (TM, 1)
    d = (dec_y - dec) ** 2 + eps                                       # (TM, mu)

    # Fold the tile contribution into the resident vreg-shaped accumulator:
    # only elementwise VALU adds per step; the final reduce is in the wrapper.
    contrib = (d * p).reshape(tile_rows // 8, 8, mu)
    out_ref[...] += jnp.sum(contrib, axis=0, keepdims=True)            # (1, 8, mu)


def emd_loss_pallas(pred_y, true_y, mu, eps=1e-3, tile_rows=1024, num_shards=2):
    """pred_y: (N, mu) float32, true_y: (N,) int -> scalar float32 EMD loss."""
    N, mu_in = pred_y.shape
    assert mu_in == mu, "pred_y last dim must equal mu"

    pred_y = pred_y.astype(jnp.float32)                 # no-op copy if already f32
    labels = true_y.astype(jnp.int32).reshape(N, 1)     # tiny
    dec = decode_mu_law_jnp(jnp.arange(mu), mu=mu).astype(jnp.float32)
    dec_y = jnp.take(dec, true_y.astype(jnp.int32)).reshape(N, 1)  # tiny XLA gather
    dec_tab = dec.reshape(1, mu)

    # Tile sizing: multiple of 8 (sublane rule); big enough to amortize the
    # per-grid-step overhead, small enough to fit default scoped VMEM
    # everywhere (pred block 1 MiB at 1024x256 f32, double-buffered).
    tile_rows = max(8, min(tile_rows, _round_up(N, 8)))
    n_tiles = _cdiv(N, tile_rows)

    # Leading "parallel" axis for v7x megacore; collapses to 1 for tiny inputs.
    num_shards = max(1, min(num_shards, n_tiles))
    tps = _cdiv(n_tiles, num_shards)

    if num_shards * tps == n_tiles:
        # Exact split: plain affine index map.
        row_map = lambda s, j: (s * tps + j, 0)
    else:
        # Clamp fully out-of-range tiles onto the last real tile; the in-kernel
        # validity mask (based on the unclamped index) zeroes their contribution.
        row_map = lambda s, j: (jnp.minimum(s * tps + j, n_tiles - 1), 0)

    kernel = functools.partial(_emd_kernel, n_rows=N, eps=float(eps))

    out = pl.pallas_call(
        kernel,
        out_shape=jax.ShapeDtypeStruct((num_shards, 8, mu), jnp.float32),
        grid_spec=pltpu.PrefetchScalarGridSpec(
            num_scalar_prefetch=0,
            grid=(num_shards, tps),
            in_specs=[
                pl.BlockSpec((tile_rows, mu), row_map),        # predictions
                pl.BlockSpec((tile_rows, 1), row_map),         # labels
                pl.BlockSpec((tile_rows, 1), row_map),         # dec[true_y]
                pl.BlockSpec((1, mu), lambda s, j: (0, 0)),    # decode table
            ],
            out_specs=pl.BlockSpec((1, 8, mu), lambda s, j: (s, 0, 0)),
        ),
        compiler_params=pltpu.CompilerParams(
            dimension_semantics=("parallel", "arbitrary"),
        ),
        cost_estimate=pl.CostEstimate(
            flops=10 * N * mu,
            transcendentals=N * mu,
            bytes_accessed=N * mu * 4 + N * 8 + mu * 4 + num_shards * 8 * mu * 4,
        ),
    )(pred_y, labels, dec_y, dec_tab)

    # Single final reduction over the tiny (num_shards, 8, mu) partials.
    return -jnp.sum(out)


def emd_loss_ref(pred_y, true_y, mu, eps=1e-3):
    """Plain-JAX reference reproducing the PyTorch forward."""
    dec = decode_mu_law_jnp(jnp.arange(mu), mu=mu)
    d_full = (dec[:, None] - dec[None, :]) ** 2
    one_hot = jax.nn.one_hot(true_y, mu, dtype=jnp.float32)
    p = jnp.log(jnp.abs(1.0 - one_hot - pred_y.astype(jnp.float32)))
    d = d_full[true_y] + eps
    return -jnp.sum(d * p)


if __name__ == "__main__":
    mu = 256          # wavenet mu-law quantization levels
    B, T = 2, 16      # small demo: 2 sequences of length 16
    N = B * T

    key = jax.random.PRNGKey(0)
    k1, k2 = jax.random.split(key)
    logits = jax.random.normal(k1, (N, mu), dtype=jnp.float32)
    pred_y = jax.nn.softmax(logits, axis=-1)                       # (N, mu) probs
    true_y = jax.random.randint(k2, (N,), 0, mu, dtype=jnp.int32)  # (N,) labels

    loss = emd_loss_pallas(pred_y, true_y, mu=mu, eps=1e-3)
    jax.block_until_ready(loss)

    ref = emd_loss_ref(pred_y, true_y, mu=mu, eps=1e-3)
    assert loss.shape == ()
    assert bool(jnp.isfinite(loss))
    assert bool(jnp.allclose(loss, ref, rtol=1e-4, atol=1e-3)), (loss, ref)

    print("KERNEL_OK")
</pallas_src>

<mosaic_0001>
module attributes {stable_mosaic.version = 11 : i64} {
  func.func @_emd_kernel(%arg0: i32, %arg1: i32, %arg2: memref<32x256xf32, #tpu.memory_space<vmem>>, %arg3: memref<32x1xi32, #tpu.memory_space<vmem>>, %arg4: memref<32x1xf32, #tpu.memory_space<vmem>>, %arg5: memref<1x256xf32, #tpu.memory_space<vmem>>, %arg6: memref<1x8x256xf32, #tpu.memory_space<vmem>>) attributes {dimension_semantics = [#tpu.dimension_semantics<parallel>, #tpu.dimension_semantics<arbitrary>], iteration_bounds = array<i64: 1, 1>, scalar_prefetch = 0 : i64, scratch_operands = 0 : i64, tpu.core_type = #tpu.core_type<tc>, window_params = [{transform_indices = @transform_0, window_bounds = array<i64: 32, 256>}, {transform_indices = @transform_1, window_bounds = array<i64: 32, 1>}, {transform_indices = @transform_2, window_bounds = array<i64: 32, 1>}, {pipeline_mode = #tpu.pipeline_mode<synchronous>, transform_indices = @transform_3, window_bounds = array<i64: 1, 256>}, {transform_indices = @transform_4, window_bounds = array<i64: 1, 8, 256>}]} {
    %c0_i32 = arith.constant 0 : i32
    %0 = arith.cmpi eq, %arg1, %c0_i32 : i32
    %1 = arith.extui %0 : i1 to i32
    %c0_i32_0 = arith.constant 0 : i32
    %2 = arith.cmpi ne, %1, %c0_i32_0 : i32
    scf.if %2 {
      %cst_19 = arith.constant 0.000000e+00 : f32
      %42 = vector.broadcast %cst_19 : f32 to vector<1x8x256xf32>
      %c0_20 = arith.constant 0 : index
      %c0_21 = arith.constant 0 : index
      %c0_22 = arith.constant 0 : index
      %43 = vector.load %arg6[%c0_20, %c0_21, %c0_22] : memref<1x8x256xf32, #tpu.memory_space<vmem>>, vector<1x8x256xf32>
      tpu.vector_store %arg6[%c0_20, %c0_21, %c0_22], %42 {strides = array<i32>} : memref<1x8x256xf32, #tpu.memory_space<vmem>>, vector<1x8x256xf32>,
    } else {
    }
    %c1_i32 = arith.constant 1 : i32
    %3 = arith.muli %arg0, %c1_i32 : i32
    %4 = arith.addi %3, %arg1 : i32
    %c32_i32 = arith.constant 32 : i32
    %5 = arith.muli %4, %c32_i32 : i32
    %c0 = arith.constant 0 : index
    %c0_1 = arith.constant 0 : index
    %6 = vector.load %arg2[%c0, %c0_1] : memref<32x256xf32, #tpu.memory_space<vmem>>, vector<32x256xf32>
    %c0_2 = arith.constant 0 : index
    %c0_3 = arith.constant 0 : index
    %7 = vector.load %arg3[%c0_2, %c0_3] : memref<32x1xi32, #tpu.memory_space<vmem>>, vector<32x1xi32>
    %c0_4 = arith.constant 0 : index
    %c0_5 = arith.constant 0 : index
    %8 = vector.load %arg5[%c0_4, %c0_5] : memref<1x256xf32, #tpu.memory_space<vmem>>, vector<1x256xf32>
    %9 = tpu.iota {dimensions = array<i32: 0>} : vector<32x1xi32>
    %10 = vector.broadcast %5 : i32 to vector<32x1xi32>
    %11 = arith.addi %10, %9 : vector<32x1xi32>
    %c32_i32_6 = arith.constant 32 : i32
    %12 = vector.broadcast %c32_i32_6 : i32 to vector<32x1xi32>
    %13 = arith.cmpi slt, %11, %12 : vector<32x1xi32>
    %14 = tpu.iota {dimensions = array<i32: 1>} : vector<32x256xi32>
    %15 = vector.broadcast %7 : vector<32x1xi32> to vector<32x256xi32>
    %16 = arith.cmpi eq, %14, %15 : vector<32x256xi32>
    %cst = arith.constant 1.000000e+00 : f32
    %17 = vector.broadcast %cst : f32 to vector<32x256xf32>
    %18 = arith.subf %17, %6 : vector<32x256xf32>
    %19 = arith.select %16, %6, %18 : vector<32x256xi1>, vector<32x256xf32>
    %20 = math.absf %19 : vector<32x256xf32>
    %cst_7 = arith.constant 1.000000e+00 : f32
    %21 = vector.shape_cast %13 : vector<32x1xi1> to vector<32x1xi1>
    %22 = vector.broadcast %21 : vector<32x1xi1> to vector<32x256xi1>
    %23 = vector.broadcast %cst_7 : f32 to vector<32x256xf32>
    %24 = arith.select %22, %20, %23 : vector<32x256xi1>, vector<32x256xf32>
    %25 = math.log %24 : vector<32x256xf32>
    %c0_8 = arith.constant 0 : index
    %c0_9 = arith.constant 0 : index
    %26 = vector.load %arg4[%c0_8, %c0_9] : memref<32x1xf32, #tpu.memory_space<vmem>>, vector<32x1xf32>
    %cst_10 = arith.constant 0.000000e+00 : f32
    %27 = vector.broadcast %cst_10 : f32 to vector<32x1xf32>
    %28 = arith.select %13, %26, %27 : vector<32x1xi1>, vector<32x1xf32>
    %29 = vector.broadcast %28 : vector<32x1xf32> to vector<32x256xf32>
    %30 = vector.broadcast %8 : vector<1x256xf32> to vector<32x256xf32>
    %31 = arith.subf %29, %30 : vector<32x256xf32>
    %32 = arith.mulf %31, %31 : vector<32x256xf32>
    %cst_11 = arith.constant 1.000000e-03 : f32
    %33 = vector.broadcast %cst_11 : f32 to vector<32x256xf32>
    %34 = arith.addf %32, %33 : vector<32x256xf32>
    %35 = arith.mulf %34, %25 : vector<32x256xf32>
    %36 = vector.shape_cast %35 : vector<32x256xf32> to vector<4x8x256xf32>
    %c0_12 = arith.constant 0 : index
    %c0_13 = arith.constant 0 : index
    %c0_14 = arith.constant 0 : index
    %37 = vector.load %arg6[%c0_12, %c0_13, %c0_14] : memref<1x8x256xf32, #tpu.memory_space<vmem>>, vector<1x8x256xf32>
    %cst_15 = arith.constant dense<0.000000e+00> : vector<8x256xf32>
    %38 = vector.multi_reduction <add>, %36, %cst_15 [0] : vector<4x8x256xf32> to vector<8x256xf32>
    %39 = vector.shape_cast %38 : vector<8x256xf32> to vector<1x8x256xf32>
    %40 = arith.addf %37, %39 : vector<1x8x256xf32>
    %c0_16 = arith.constant 0 : index
    %c0_17 = arith.constant 0 : index
    %c0_18 = arith.constant 0 : index
    %41 = vector.load %arg6[%c0_16, %c0_17, %c0_18] : memref<1x8x256xf32, #tpu.memory_space<vmem>>, vector<1x8x256xf32>
    tpu.vector_store %arg6[%c0_16, %c0_17, %c0_18], %40 {strides = array<i32>} : memref<1x8x256xf32, #tpu.memory_space<vmem>>, vector<1x8x256xf32>,
    return
  }
  func.func @transform_0(%arg0: i32, %arg1: i32) -> (i32, i32) {
    %c1_i32 = arith.constant 1 : i32
    %0 = arith.muli %arg0, %c1_i32 : i32
    %1 = arith.addi %0, %arg1 : i32
    %c0_i32 = arith.constant 0 : i32
    %c0_i32_0 = arith.constant 0 : i32
    return %1, %c0_i32 : i32, i32
  }
  func.func @transform_1(%arg0: i32, %arg1: i32) -> (i32, i32) {
    %c1_i32 = arith.constant 1 : i32
    %0 = arith.muli %arg0, %c1_i32 : i32
    %1 = arith.addi %0, %arg1 : i32
    %c0_i32 = arith.constant 0 : i32
    %c0_i32_0 = arith.constant 0 : i32
    return %1, %c0_i32 : i32, i32
  }
  func.func @transform_2(%arg0: i32, %arg1: i32) -> (i32, i32) {
    %c1_i32 = arith.constant 1 : i32
    %0 = arith.muli %arg0, %c1_i32 : i32
    %1 = arith.addi %0, %arg1 : i32
    %c0_i32 = arith.constant 0 : i32
    %c0_i32_0 = arith.constant 0 : i32
    return %1, %c0_i32 : i32, i32
  }
  func.func @transform_3(%arg0: i32, %arg1: i32) -> (i32, i32) {
    %c0_i32 = arith.constant 0 : i32
    %c0_i32_0 = arith.constant 0 : i32
    %c0_i32_1 = arith.constant 0 : i32
    return %c0_i32, %c0_i32_0 : i32, i32
  }
  func.func @transform_4(%arg0: i32, %arg1: i32) -> (i32, i32, i32) {
    %c0_i32 = arith.constant 0 : i32
    %c0_i32_0 = arith.constant 0 : i32
    %c0_i32_1 = arith.constant 0 : i32
    return %arg0, %c0_i32, %c0_i32_0 : i32, i32, i32
  }
}

</mosaic_0001>

<llo_original>
// kernel: tpu_custom_call.1
$region0: #{tpu_custom_call.1}
  #allocation0 [shape = 'u32[]', space=smem, size = 0x4, offset = 0x4, fixed_abs, tag = 'smem constant byte address 0x4 - core index']
  #allocation1 [shape = 'u32[72,128]{1,0:T(1,128)}', space=vmem, size = 0x9000, scoped, tag = 'internal scratch']
  %s0 = inlined_call_operand.vmem [shape: f32[32,256], index: 0, kind: input, shape index: {}]
  %s1 = inlined_call_operand.vmem [shape: s32[32,1], index: 1, kind: input, shape index: {}]
  %s2 = inlined_call_operand.vmem [shape: f32[32,1], index: 2, kind: input, shape index: {}]
  %s3 = inlined_call_operand.vmem [shape: f32[1,256], index: 3, kind: input, shape index: {}]
  %s4 = inlined_call_operand.hbm [shape: f32[1,8,256], index: 4, kind: output, shape index: {}]
  %s5 = sld [smem:[#allocation0]]
  $region30: #{tpu_custom_call.1} parent=0
    _
  %s7 = ssub.s32 1, %s5
  %s8 = scalar_select 0, %s7, %s5
  $region1: #{tpu_custom_call.1} parent=0
    #allocation2 [shape = 'u8[8192]{0}', space=vmem, size = 0x2000, scoped, tag = 'output window, operand 0, single buffered']
    #allocation3 [shape = 's32[1]{0}', space=sflag, size = 0x4, scoped, tag = 'scoped memory for tpu_custom_call.1']
    %9 = vsyncpa [#allocation3], 0
    // Predicated region
    $region2: #{tpu_custom_call.1} parent=1 // pred_check
      _
    $region3: #{tpu_custom_call.1} parent=1 // pred_check_branch
      %11 = sbr.rel (0) target = $region5
    $region4: #{tpu_custom_call.1} parent=1 // pred_region
      %s12 = sadd.s32 0, 0
      %s13 = smul.u32 4, %s12
      %p14 = scmp.lt.s32.totalorder %s13, 3
      %s15 = scalar_select %p14, %s13, 3
      %s16 = smul.addr %s15, 2
      %s17 = smul.addr %s16, 8
      %s18 = scalar_lea.vmem %s0, %s17
      %s19 = sadd.s32 0, 0
      %s20 = smul.u32 4, %s19
    $region5: #{tpu_custom_call.1} parent=1 // pred_fallthru
      _
    // Predicated region
    $region6: #{tpu_custom_call.1} parent=1 // pred_check
      _
    $region7: #{tpu_custom_call.1} parent=1 // pred_check_branch
      %22 = sbr.rel (0) target = $region9
    $region8: #{tpu_custom_call.1} parent=1 // pred_region
      %s23 = sadd.s32 0, 0
      %s24 = smul.u32 4, %s23
      %p25 = scmp.lt.s32.totalorder %s24, 3
      %s26 = scalar_select %p25, %s24, 3
      %s27 = smul.addr %s26, 8
      %s28 = scalar_lea.vmem %s1, %s27
      %s29 = sadd.s32 0, 0
      %s30 = smul.u32 4, %s29
    $region9: #{tpu_custom_call.1} parent=1 // pred_fallthru
      _
    // Predicated region
    $region10: #{tpu_custom_call.1} parent=1 // pred_check
      _
    $region11: #{tpu_custom_call.1} parent=1 // pred_check_branch
      %32 = sbr.rel (0) target = $region13
    $region12: #{tpu_custom_call.1} parent=1 // pred_region
      %s33 = sadd.s32 0, 0
      %s34 = smul.u32 4, %s33
      %p35 = scmp.lt.s32.totalorder %s34, 3
      %s36 = scalar_select %p35, %s34, 3
      %s37 = smul.addr %s36, 8
      %s38 = scalar_lea.vmem %s2, %s37
      %s39 = sadd.s32 0, 0
      %s40 = smul.u32 4, %s39
    $region13: #{tpu_custom_call.1} parent=1 // pred_fallthru
      _
    // Predicated region
    $region14: #{tpu_custom_call.1} parent=1 // pred_check
      _
    $region15: #{tpu_custom_call.1} parent=1 // pred_check_branch
      %42 = sbr.rel (0) target = $region17
    $region16: #{tpu_custom_call.1} parent=1 // pred_region
      _
    $region17: #{tpu_custom_call.1} parent=1 // pred_fallthru
      _
    %s43 = sadd.s32 0, 0
    %s44 = smul.u32 4, %s43
    %p45 = scmp.lt.s32.totalorder %s44, 3
    %s46 = scalar_select %p45, %s44, 3
    %s47 = smul.addr %s46, 2
    %s48 = smul.addr %s47, 8
    %s49 = scalar_lea.vmem %s0, %s48
    %s50 = sadd.s32 0, 0
    %s51 = smul.u32 4, %s50
    %p52 = scmp.lt.s32.totalorder %s51, 3
    %s53 = scalar_select %p52, %s51, 3
    %s54 = smul.addr %s53, 8
    %s55 = scalar_lea.vmem %s1, %s54
    %s56 = sadd.s32 0, 0
    %s57 = smul.u32 4, %s56
    %p58 = scmp.lt.s32.totalorder %s57, 3
    %s59 = scalar_select %p58, %s57, 3
    %s60 = smul.addr %s59, 8
    %s61 = scalar_lea.vmem %s2, %s60
    %s62 = sadd.s32 0, 0
    %s63 = smul.u32 4, %s62
    %p64 = scmp.lt.s32.totalorder %s63, 3
    %s65 = scalar_select %p64, %s63, 3
    %s66 = smul.addr %s65, 2
    %s67 = smul.addr %s66, 8
    %s68 = scalar_lea.vmem %s0, %s67
    %s69 = sadd.s32 0, 0
    %s70 = smul.u32 4, %s69
    %s71 = sadd.s32 0, 0
    %s72 = smul.u32 4, %s71
    %p73 = scmp.lt.s32.totalorder %s72, 3
    %s74 = scalar_select %p73, %s72, 3
    %s75 = smul.addr %s74, 8
    %s76 = scalar_lea.vmem %s1, %s75
    %s77 = sadd.s32 0, 0
    %s78 = smul.u32 4, %s77
    %s79 = sadd.s32 0, 0
    %s80 = smul.u32 4, %s79
    %p81 = scmp.lt.s32.totalorder %s80, 3
    %s82 = scalar_select %p81, %s80, 3
    %s83 = smul.addr %s82, 8
    %s84 = scalar_lea.vmem %s2, %s83
    %s85 = sadd.s32 0, 0
    %s86 = smul.u32 4, %s85
    %p87 = scmp.eq.s32.totalorder 0, 0
    // Predicated region
    $region18: #{tpu_custom_call.1} parent=1 // pred_check
      %p88 = pneg %p87
    $region19: #{tpu_custom_call.1} parent=1 // pred_check_branch
      %90 = sbr.rel (%p88) target = $region21
    $region20: #{tpu_custom_call.1} parent=1 // pred_region
      %91 = vst [vmem:[#allocation2] sm:$0xff] 0.0
      %92 = vst [vmem:[#allocation2 + $0x8] sm:$0xff] 0.0
    $region21: #{tpu_custom_call.1} parent=1 // pred_fallthru
      _
    %s93 = sadd.s32 0, 0
    %s94 = smul.u32 %s93, 32
    %v95 = vld [vmem:[%s68] sm:$0xff]
    %v96 = vld [vmem:[%s68 + $0x8] sm:$0xff]
    %v97 = vld [vmem:[%s68 + $0x10] sm:$0xff]
    %v98 = vld [vmem:[%s68 + $0x18] sm:$0xff]
    %v99 = vld [vmem:[%s68 + $0x20] sm:$0xff]
    %v100 = vld [vmem:[%s68 + $0x28] sm:$0xff]
    %v101 = vld [vmem:[%s68 + $0x30] sm:$0xff]
    %v102 = vld [vmem:[%s68 + $0x38] sm:$0xff]
    %v103 = vld [vmem:[%s76] sm:$0xff]
    %v104 = vld [vmem:[%s76 + $0x8] sm:$0xff]
    %v105 = vld [vmem:[%s76 + $0x10] sm:$0xff]
    %v106 = vld [vmem:[%s76 + $0x18] sm:$0xff]
    %v107 = vld [vmem:[%s3] sm:$0x3]
    %v108 = vlaneseq
    %v109 = vshrl.u32 %v108, 7
    %v110 = vadd.s32 %v109, 8
    %v111 = vadd.s32 %v109, 16
    %v112 = vadd.s32 %v109, 24
    %v113 = vstv %s94
    %v114 = vadd.s32 %v113, %v109
    %v115 = vadd.s32 %v113, %v110
    %v116 = vadd.s32 %v113, %v111
    %v117 = vadd.s32 %v113, %v112
    %vm118 = vcmp.lt.s32.totalorder %v114, 32
    %vm119 = vcmp.lt.s32.totalorder %v115, 32
    %vm120 = vcmp.lt.s32.totalorder %v116, 32
    %vm121 = vcmp.lt.s32.totalorder %v117, 32
    %v122 = vlaneseq
    %v123 = vand.u32 %v122, 127
    %v124 = vadd.s32 %v123, 128
    %125 = vset.pattern.permute.xlu0 0
    %126 = vperm.xlu0 %125, %v103
    %v127 = vpop.permute.xlu0 %126
    %128 = vset.pattern.permute.xlu0 0
    %129 = vperm.xlu0 %128, %v104
    %v130 = vpop.permute.xlu0 %129
    %131 = vset.pattern.permute.xlu0 0
    %132 = vperm.xlu0 %131, %v105
    %v133 = vpop.permute.xlu0 %132
    %134 = vset.pattern.permute.xlu0 0
    %135 = vperm.xlu0 %134, %v106
    %v136 = vpop.permute.xlu0 %135
    %vm137 = vcmp.eq.s32.totalorder %v123, %v127
    %vm138 = vcmp.eq.s32.totalorder %v124, %v127
    %vm139 = vcmp.eq.s32.totalorder %v123, %v130
    %vm140 = vcmp.eq.s32.totalorder %v124, %v130
    %vm141 = vcmp.eq.s32.totalorder %v123, %v133
    %vm142 = vcmp.eq.s32.totalorder %v124, %v133
    %vm143 = vcmp.eq.s32.totalorder %v123, %v136
    %vm144 = vcmp.eq.s32.totalorder %v124, %v136
    %v145 = vsub.f32 1.0, %v95
    %v146 = vsub.f32 1.0, %v96
    %v147 = vsub.f32 1.0, %v97
    %v148 = vsub.f32 1.0, %v98
    %v149 = vsub.f32 1.0, %v99
    %v150 = vsub.f32 1.0, %v100
    %v151 = vsub.f32 1.0, %v101
    %v152 = vsub.f32 1.0, %v102
    %v153 = vsel %vm137, %v95, %v145
    %v154 = vsel %vm138, %v96, %v146
    %v155 = vsel %vm139, %v97, %v147
    %v156 = vsel %vm140, %v98, %v148
    %v157 = vsel %vm141, %v99, %v149
    %v158 = vsel %vm142, %v100, %v150
    %v159 = vsel %vm143, %v101, %v151
    %v160 = vsel %vm144, %v102, %v152
    %v161 = vand.u32 2147483647, %v153
    %v162 = vand.u32 2147483647, %v154
    %v163 = vand.u32 2147483647, %v155
    %v164 = vand.u32 2147483647, %v156
    %v165 = vand.u32 2147483647, %v157
    %v166 = vand.u32 2147483647, %v158
    %v167 = vand.u32 2147483647, %v159
    %v168 = vand.u32 2147483647, %v160
    %v169 = vsel %vm118, 1, 0
    %v170 = vsel %vm119, 1, 0
    %v171 = vsel %vm120, 1, 0
    %v172 = vsel %vm121, 1, 0
    %vm173 = vcmp.eq.s32.totalorder %v169, 1
    %vm174 = vcmp.eq.s32.totalorder %v170, 1
    %vm175 = vcmp.eq.s32.totalorder %v171, 1
    %vm176 = vcmp.eq.s32.totalorder %v172, 1
    %v177 = vsel %vm173, %v161, 1.0
    %v178 = vsel %vm173, %v162, 1.0
    %v179 = vsel %vm174, %v163, 1.0
    %v180 = vsel %vm174, %v164, 1.0
    %v181 = vsel %vm175, %v165, 1.0
    %v182 = vsel %vm175, %v166, 1.0
    %v183 = vsel %vm176, %v167, 1.0
    %v184 = vsel %vm176, %v168, 1.0
    %v185 = vlog2.pop %v177
    %v186 = vmul.f32 %v185, 0.6931472
    %v187 = vlog2.pop %v178
    %v188 = vmul.f32 %v187, 0.6931472
    %v189 = vlog2.pop %v179
    %v190 = vmul.f32 %v189, 0.6931472
    %v191 = vlog2.pop %v180
    %v192 = vmul.f32 %v191, 0.6931472
    %v193 = vlog2.pop %v181
    %v194 = vmul.f32 %v193, 0.6931472
    %v195 = vlog2.pop %v182
    %v196 = vmul.f32 %v195, 0.6931472
    %v197 = vlog2.pop %v183
    %v198 = vmul.f32 %v197, 0.6931472
    %v199 = vlog2.pop %v184
    %v200 = vmul.f32 %v199, 0.6931472
    %v201 = vld [vmem:[%s84] sm:$0xff]
    %v202 = vld [vmem:[%s84 + $0x8] sm:$0xff]
    %v203 = vld [vmem:[%s84 + $0x10] sm:$0xff]
    %v204 = vld [vmem:[%s84 + $0x18] sm:$0xff]
    %v205 = vsel %vm118, %v201, 0.0
    %v206 = vsel %vm119, %v202, 0.0
    %v207 = vsel %vm120, %v203, 0.0
    %v208 = vsel %vm121, %v204, 0.0
    %210 = vset.pattern.permute.xlu0 0
    %211 = vperm.xlu0 %210, %v205
    %v212 = vpop.permute.xlu0 %211
    %215 = vset.pattern.permute.xlu0 0
    %216 = vperm.xlu0 %215, %v206
    %v217 = vpop.permute.xlu0 %216
    %220 = vset.pattern.permute.xlu0 0
    %221 = vperm.xlu0 %220, %v207
    %v222 = vpop.permute.xlu0 %221
    %225 = vset.pattern.permute.xlu0 0
    %226 = vperm.xlu0 %225, %v208
    %v227 = vpop.permute.xlu0 %226
    %v230 = vperm.slane %v107, 0
    %v231 = vperm.slane %v107, 1
    %v234 = vsub.f32 %v212, %v230
    %v235 = vsub.f32 %v212, %v231
    %v236 = vsub.f32 %v217, %v230
    %v237 = vsub.f32 %v217, %v231
    %v238 = vsub.f32 %v222, %v230
    %v239 = vsub.f32 %v222, %v231
    %v240 = vsub.f32 %v227, %v230
    %v241 = vsub.f32 %v227, %v231
    %v242 = vmul.f32 %v234, %v234
    %v243 = vmul.f32 %v235, %v235
    %v244 = vmul.f32 %v236, %v236
    %v245 = vmul.f32 %v237, %v237
    %v246 = vmul.f32 %v238, %v238
    %v247 = vmul.f32 %v239, %v239
    %v248 = vmul.f32 %v240, %v240
    %v249 = vmul.f32 %v241, %v241
    %v250 = vadd.f32 %v242, 0.001
    %v251 = vadd.f32 %v243, 0.001
    %v252 = vadd.f32 %v244, 0.001
    %v253 = vadd.f32 %v245, 0.001
    %v254 = vadd.f32 %v246, 0.001
    %v255 = vadd.f32 %v247, 0.001
    %v256 = vadd.f32 %v248, 0.001
    %v257 = vadd.f32 %v249, 0.001
    %v258 = vmul.f32 %v250, %v186
    %v259 = vmul.f32 %v251, %v188
    %v260 = vmul.f32 %v252, %v190
    %v261 = vmul.f32 %v253, %v192
    %v262 = vmul.f32 %v254, %v194
    %v263 = vmul.f32 %v255, %v196
    %v264 = vmul.f32 %v256, %v198
    %v265 = vmul.f32 %v257, %v200
    %v266 = vld [vmem:[#allocation2] sm:$0xff]
    %v267 = vld [vmem:[#allocation2 + $0x8] sm:$0xff]
    %v268 = vadd.f32 %v258, %v260
    %v269 = vadd.f32 %v268, %v262
    %v270 = vadd.f32 %v269, %v264
    %v271 = vadd.f32 %v259, %v261
    %v272 = vadd.f32 %v271, %v263
    %v273 = vadd.f32 %v272, %v265
    %v274 = vadd.f32 %v266, %v270
    %v275 = vadd.f32 %v267, %v273
    %276 = vst [vmem:[#allocation2] sm:$0xff] %v274
    %277 = vst [vmem:[#allocation2 + $0x8] sm:$0xff] %v275
    // Predicated region
    $region22: #{tpu_custom_call.1} parent=1 // pred_check
      _
    $region23: #{tpu_custom_call.1} parent=1 // pred_check_branch
      %279 = sbr.rel (0) target = $region25
    $region24: #{tpu_custom_call.1} parent=1 // pred_region
      %281 = vsyncadd [#allocation3], 0
      %s283 = sshll.u32 [#allocation2], 4
      %s284 = int_to_ptr.vmem [resolvable:$true] %s283
      %s285 = sshll.u32 %s4, 4
      %s286 = int_to_ptr.hbm [resolvable:$true] %s285
      %288 = dma.vmem_to_hbm [thread:$0]  %s284, 256, %s286, [#allocation3]
    $region25: #{tpu_custom_call.1} parent=1 // pred_fallthru
      _
    // Predicated region
    $region26: #{tpu_custom_call.1} parent=1 // pred_check
      _
    $region27: #{tpu_custom_call.1} parent=1 // pred_check_branch
      %290 = sbr.rel (0) target = $region29
    $region28: #{tpu_custom_call.1} parent=1 // pred_region
      %292 = dma.done [#allocation3], 256
    $region29: #{tpu_custom_call.1} parent=1 // pred_fallthru
      _
    %293 = vsyncpa [#allocation3], 1

</llo_original>
